<compile_context>
chip_gen: v7x
topology: tpu7x:2x2x1
jax: 0.10.0
libtpu: 0.0.40
codegen_flags: <defaults>
</compile_context>

<pallas_src>
import numpy as np
import jax
import jax.numpy as jnp
from jax.experimental import pallas as pl
from jax.experimental.pallas import tpu as pltpu

# Fixed (requires_grad=False) ImageNet normalization constants from __init__.
IMG_MEAN = (0.485, 0.456, 0.406)
IMG_STD = (0.229, 0.224, 0.225)


def _interp_matrix(out_size: int, in_size: int) -> np.ndarray:
    """1-D linear interpolation matrix, align_corners=True semantics.

    Identity when out_size == in_size (so the module's resize-skip branch is
    reproduced exactly)."""
    m = np.zeros((out_size, in_size), dtype=np.float32)
    if out_size == 1 or in_size == 1:
        m[:, 0] = 1.0
        return m
    scale = (in_size - 1) / (out_size - 1)
    for i in range(out_size):
        src = i * scale
        i0 = min(int(np.floor(src)), in_size - 1)
        i1 = min(i0 + 1, in_size - 1)
        w1 = float(src - i0)
        m[i, i0] += 1.0 - w1
        m[i, i1] += w1
    return m


def _fused_kernel(x_ref, w_ref, b_ref, out_ref, acc_ref):
    #   x_ref   : (TB, tk)     f32 raw image tile (cast to bf16 on-chip)
    #   w_ref   : (tk, Epad)   bf16 fused weight tile
    #   b_ref   : (1, Epad)    f32 fused bias
    #   out_ref : (TB, Epad)   f32 embeddings (lane-dense, 128-multiple width)
    #   acc_ref : (TB, Epad)   f32 accumulator (VMEM scratch)
    k = pl.program_id(1)

    @pl.when(k == 0)
    def _init():
        # Fold the bias into the accumulator init (one add per batch block).
        acc_ref[...] = jnp.zeros_like(acc_ref) + b_ref[...]

    # Cast the f32 tile to bf16 in VMEM (cheap VPU work, hidden under the
    # HBM-bound x stream) and accumulate in f32 on the MXU.
    acc_ref[...] += jnp.dot(x_ref[...].astype(jnp.bfloat16), w_ref[...],
                            preferred_element_type=jnp.float32)

    @pl.when(k == pl.num_programs(1) - 1)
    def _finalize():
        out_ref[...] = acc_ref[...]


def make_fused_params(w_flat, bias, C, H, W, img_res, tk_max=2048):
    """Fold normalize + (x+1)/2 + bilinear resize + linear head into (W_eff, b_eff).

    Call once per (weight set, input resolution) and cache the result — the
    einsum + (K, Epad) materialization is per-weight work, not per-forward."""
    E = w_flat.shape[1]
    R = img_res
    K = C * H * W

    scale = jnp.asarray([0.5 / s for s in IMG_STD], jnp.float32)                   # (C,)
    offset = jnp.asarray([(0.5 - m) / s for m, s in zip(IMG_MEAN, IMG_STD)],
                         jnp.float32)                                              # (C,)
    ah = jnp.asarray(_interp_matrix(R, H))                                         # (R, H)
    aw = jnp.asarray(_interp_matrix(R, W))                                         # (R, W)
    w4 = w_flat.reshape(C, R, R, E)                                                # (C, R, R, E)

    # W_eff[(c,h,w), e] = scale_c * sum_{r,s} Ah[r,h] Aw[s,w] w4[c,r,s,e]
    w_eff = jnp.einsum('c,rh,sw,crse->chwe', scale, ah, aw, w4,
                       preferred_element_type=jnp.float32).reshape(K, E)
    # b_eff[e] = b[e] + sum_{c,r,s} offset_c * rowsum(Ah)[r] * rowsum(Aw)[s] * w4[c,r,s,e]
    # (uses the actual interpolation row sums, so the fold stays correct even
    #  for resize modes whose rows do not sum to 1)
    b_eff = bias + jnp.einsum('c,r,s,crse->e', offset, ah.sum(1), aw.sum(1), w4,
                              preferred_element_type=jnp.float32)

    # Lane-dense / tile-aligned padding:
    #   E -> multiple of 128 (unmasked vst), K -> multiple of tk (even K grid).
    e_pad = 128 * pl.cdiv(E, 128)
    tk = min(tk_max, 128 * pl.cdiv(K, 128))
    k_pad = tk * pl.cdiv(K, tk)

    w_eff = jnp.pad(w_eff, ((0, k_pad - K), (0, e_pad - E))).astype(jnp.bfloat16)  # (Kpad, Epad)
    b_eff = jnp.pad(b_eff, (0, e_pad - E)).reshape(1, e_pad).astype(jnp.float32)   # (1, Epad)
    return w_eff, b_eff, tk


def base_image_embedding_fused(x, w_eff, b_eff, tk, out_dim):
    """x: (B, C, H, W) float32 in [-1, 1]; w_eff/b_eff from make_fused_params."""
    B, C, H, W = x.shape
    K = C * H * W
    k_pad, e_pad = w_eff.shape

    # Keep x in f32 (reshape is a free view) — the bf16 cast happens inside the
    # kernel, so the dominant HBM stream is read once at 4 B/elt.
    x_flat = x.reshape(B, K)
    b_pad = 8 * pl.cdiv(B, 8)
    if b_pad != B or k_pad != K:
        # Zero pad: padded K columns hit zero weight rows; padded B rows are
        # sliced off below (no cross-row reduction in the kernel).
        x_flat = jnp.pad(x_flat, ((0, b_pad - B), (0, k_pad - K)))
        # TODO(synk): for production K (~150k) prefer 128-aligned image sizes
        # (or mask the last k-tile in-kernel) so this pad never copies x.

    tb = min(b_pad, 256)
    if b_pad // tb < 2 and b_pad >= 16:
        # >= 2 batch grid steps so the "parallel" axis feeds both v7x TensorCores.
        tb = 8 * pl.cdiv(pl.cdiv(b_pad, 2), 8)

    grid = (pl.cdiv(b_pad, tb), k_pad // tk)
    # Per-step VMEM (double-buffered): tb*tk*4*2 + tk*e_pad*2*2 + tb*e_pad*4*3
    # ~= 5.5 MiB at tb=256, tk=2048, e_pad=128 -> fits v5e/v6e/v7x comfortably.

    out = pl.pallas_call(
        _fused_kernel,
        out_shape=jax.ShapeDtypeStruct((b_pad, e_pad), jnp.float32),
        grid_spec=pltpu.PrefetchScalarGridSpec(
            num_scalar_prefetch=0,
            grid=grid,
            in_specs=[
                pl.BlockSpec((tb, tk), lambda i, k: (i, k)),      # x  (f32)
                pl.BlockSpec((tk, e_pad), lambda i, k: (k, 0)),   # fused weight (bf16)
                pl.BlockSpec((1, e_pad), lambda i, k: (0, 0)),    # fused bias (f32, tiny)
            ],
            out_specs=pl.BlockSpec((tb, e_pad), lambda i, k: (i, 0)),
            scratch_shapes=[pltpu.VMEM((tb, e_pad), jnp.float32)],
        ),
        compiler_params=pltpu.CompilerParams(
            dimension_semantics=("parallel", "arbitrary"),
            vmem_limit_bytes=48 * 1024 * 1024,
        ),
    )(x_flat, w_eff, b_eff)

    return out[:B, :out_dim]


def base_image_embedding(x, w_flat, bias, img_res):
    """Convenience wrapper: fold + kernel (fold should be cached in real use)."""
    B, C, H, W = x.shape
    w_eff, b_eff, tk = make_fused_params(w_flat, bias, C, H, W, img_res)
    return base_image_embedding_fused(x, w_eff, b_eff, tk, out_dim=w_flat.shape[1])


def reference(x, w_flat, bias, img_res):
    """Pure-JAX f32 reference of the same forward pass (for validation)."""
    B, C, H, W = x.shape
    mean = jnp.asarray(IMG_MEAN, jnp.float32).reshape(1, C, 1, 1)
    std = jnp.asarray(IMG_STD, jnp.float32).reshape(1, C, 1, 1)
    xn = ((x + 1.0) / 2.0 - mean) / std
    ah = jnp.asarray(_interp_matrix(img_res, H))
    aw = jnp.asarray(_interp_matrix(img_res, W))
    y = jnp.einsum('rh,bchw,sw->bcrs', ah, xn, aw)   # bilinear, align_corners=True
    feat = y.reshape(B, -1)
    return feat @ w_flat + bias[None, :]


if __name__ == "__main__":
    IMG_RES, E = 16, 32
    C = 3

    key = jax.random.PRNGKey(0)
    kx, kw, kb, kx2 = jax.random.split(key, 4)
    w_flat = jax.random.normal(kw, (C * IMG_RES * IMG_RES, E), jnp.float32)
    w_flat = w_flat / np.sqrt(C * IMG_RES * IMG_RES)
    bias = 0.01 * jax.random.normal(kb, (E,), jnp.float32)

    # Case 1: spatial != img_res -> the bilinear-interpolate path runs.
    x = jax.random.uniform(kx, (2, C, 12, 12), jnp.float32, minval=-1.0, maxval=1.0)
    out = jax.block_until_ready(base_image_embedding(x, w_flat, bias, IMG_RES))
    ref = reference(x, w_flat, bias, IMG_RES)
    np.testing.assert_allclose(np.asarray(out), np.asarray(ref), rtol=2e-2, atol=2e-2)

    # Case 2: spatial == img_res -> the module's resize-skip branch (identity interp).
    x2 = jax.random.uniform(kx2, (2, C, IMG_RES, IMG_RES), jnp.float32,
                            minval=-1.0, maxval=1.0)
    out2 = jax.block_until_ready(base_image_embedding(x2, w_flat, bias, IMG_RES))
    ref2 = reference(x2, w_flat, bias, IMG_RES)
    np.testing.assert_allclose(np.asarray(out2), np.asarray(ref2), rtol=2e-2, atol=2e-2)

    print("KERNEL_OK")
</pallas_src>

<mosaic_0001>
module attributes {stable_mosaic.version = 11 : i64} {
  func.func @_fused_kernel(%arg0: i32, %arg1: i32, %arg2: memref<8x512xf32, #tpu.memory_space<vmem>>, %arg3: memref<512x128xbf16, #tpu.memory_space<vmem>>, %arg4: memref<1x128xf32, #tpu.memory_space<vmem>>, %arg5: memref<8x128xf32, #tpu.memory_space<vmem>>, %arg6: memref<8x128xf32, #tpu.memory_space<vmem>>) attributes {dimension_semantics = [#tpu.dimension_semantics<parallel>, #tpu.dimension_semantics<arbitrary>], iteration_bounds = array<i64: 1, 1>, scalar_prefetch = 0 : i64, scratch_operands = 1 : i64, tpu.core_type = #tpu.core_type<tc>, window_params = [{transform_indices = @transform_0, window_bounds = array<i64: 8, 512>}, {transform_indices = @transform_1, window_bounds = array<i64: 512, 128>}, {pipeline_mode = #tpu.pipeline_mode<synchronous>, transform_indices = @transform_2, window_bounds = array<i64: 1, 128>}, {transform_indices = @transform_3, window_bounds = array<i64: 8, 128>}]} {
    %c0_i32 = arith.constant 0 : i32
    %0 = arith.cmpi eq, %arg1, %c0_i32 : i32
    %1 = arith.extui %0 : i1 to i32
    %c0_i32_0 = arith.constant 0 : i32
    %2 = arith.cmpi ne, %1, %c0_i32_0 : i32
    scf.if %2 {
      %cst_10 = arith.constant 0.000000e+00 : f32
      %13 = vector.broadcast %cst_10 : f32 to vector<8x128xf32>
      %c0_11 = arith.constant 0 : index
      %c0_12 = arith.constant 0 : index
      %14 = vector.load %arg4[%c0_11, %c0_12] : memref<1x128xf32, #tpu.memory_space<vmem>>, vector<1x128xf32>
      %15 = vector.broadcast %14 : vector<1x128xf32> to vector<8x128xf32>
      %16 = arith.addf %13, %15 : vector<8x128xf32>
      %c0_13 = arith.constant 0 : index
      %c0_14 = arith.constant 0 : index
      %17 = vector.load %arg6[%c0_13, %c0_14] : memref<8x128xf32, #tpu.memory_space<vmem>>, vector<8x128xf32>
      tpu.vector_store %arg6[%c0_13, %c0_14], %16 {strides = array<i32>} : memref<8x128xf32, #tpu.memory_space<vmem>>, vector<8x128xf32>,
    } else {
    }
    %c0 = arith.constant 0 : index
    %c0_1 = arith.constant 0 : index
    %3 = vector.load %arg6[%c0, %c0_1] : memref<8x128xf32, #tpu.memory_space<vmem>>, vector<8x128xf32>
    %c0_2 = arith.constant 0 : index
    %c0_3 = arith.constant 0 : index
    %4 = vector.load %arg2[%c0_2, %c0_3] : memref<8x512xf32, #tpu.memory_space<vmem>>, vector<8x512xf32>
    %5 = arith.truncf %4 : vector<8x512xf32> to vector<8x512xbf16>
    %c0_4 = arith.constant 0 : index
    %c0_5 = arith.constant 0 : index
    %6 = vector.load %arg3[%c0_4, %c0_5] : memref<512x128xbf16, #tpu.memory_space<vmem>>, vector<512x128xbf16>
    %cst = arith.constant dense<0.000000e+00> : vector<8x128xf32>
    %7 = tpu.matmul %5, %6, %cst {dimension_numbers = #tpu.dot_dimension_numbers<[1], [0], [0], [1], [0, 0, 1, 1], [], []>} : vector<8x512xbf16>, vector<512x128xbf16>, vector<8x128xf32> -> vector<8x128xf32>
    %8 = arith.addf %3, %7 : vector<8x128xf32>
    %c0_6 = arith.constant 0 : index
    %c0_7 = arith.constant 0 : index
    %9 = vector.load %arg6[%c0_6, %c0_7] : memref<8x128xf32, #tpu.memory_space<vmem>>, vector<8x128xf32>
    tpu.vector_store %arg6[%c0_6, %c0_7], %8 {strides = array<i32>} : memref<8x128xf32, #tpu.memory_space<vmem>>, vector<8x128xf32>,
    %c0_i32_8 = arith.constant 0 : i32
    %10 = arith.cmpi eq, %arg1, %c0_i32_8 : i32
    %11 = arith.extui %10 : i1 to i32
    %c0_i32_9 = arith.constant 0 : i32
    %12 = arith.cmpi ne, %11, %c0_i32_9 : i32
    scf.if %12 {
      %c0_10 = arith.constant 0 : index
      %c0_11 = arith.constant 0 : index
      %13 = vector.load %arg6[%c0_10, %c0_11] : memref<8x128xf32, #tpu.memory_space<vmem>>, vector<8x128xf32>
      %c0_12 = arith.constant 0 : index
      %c0_13 = arith.constant 0 : index
      %14 = vector.load %arg5[%c0_12, %c0_13] : memref<8x128xf32, #tpu.memory_space<vmem>>, vector<8x128xf32>
      tpu.vector_store %arg5[%c0_12, %c0_13], %13 {strides = array<i32>} : memref<8x128xf32, #tpu.memory_space<vmem>>, vector<8x128xf32>,
    } else {
    }
    return
  }
  func.func @transform_0(%arg0: i32, %arg1: i32) -> (i32, i32) {
    %c0_i32 = arith.constant 0 : i32
    return %arg0, %arg1 : i32, i32
  }
  func.func @transform_1(%arg0: i32, %arg1: i32) -> (i32, i32) {
    %c0_i32 = arith.constant 0 : i32
    %c0_i32_0 = arith.constant 0 : i32
    return %arg1, %c0_i32 : i32, i32
  }
  func.func @transform_2(%arg0: i32, %arg1: i32) -> (i32, i32) {
    %c0_i32 = arith.constant 0 : i32
    %c0_i32_0 = arith.constant 0 : i32
    %c0_i32_1 = arith.constant 0 : i32
    return %c0_i32, %c0_i32_0 : i32, i32
  }
  func.func @transform_3(%arg0: i32, %arg1: i32) -> (i32, i32) {
    %c0_i32 = arith.constant 0 : i32
    %c0_i32_0 = arith.constant 0 : i32
    return %arg0, %c0_i32 : i32, i32
  }
}

</mosaic_0001>

<llo_original>
// kernel: tpu_custom_call.1
$region0: #{tpu_custom_call.1}
  #allocation0 [shape = 'u32[]', space=smem, size = 0x4, offset = 0x4, fixed_abs, tag = 'smem constant byte address 0x4 - core index']
  #allocation1 [shape = 'u32[144,128]{1,0:T(1,128)}', space=vmem, size = 0x12000, scoped, tag = 'internal scratch']
  #allocation2 [shape = 'f32[8,128]{1,0:T(8,128)}', space=vmem, size = 0x1000, scoped, tag = 'scratch operand']
  %s0 = inlined_call_operand.hbm [shape: f32[8,512], index: 0, kind: input, shape index: {}]
  %s1 = inlined_call_operand.hbm [shape: bf16[512,128], index: 1, kind: input, shape index: {}]
  %s2 = inlined_call_operand.vmem [shape: f32[1,128], index: 2, kind: input, shape index: {}]
  %s3 = inlined_call_operand.hbm [shape: f32[8,128], index: 3, kind: output, shape index: {}]
  %s4 = sld [smem:[#allocation0]]
  $region38: #{tpu_custom_call.1} parent=0
    _
  %s6 = ssub.s32 1, %s4
  %s7 = scalar_select 0, %s6, %s4
  $region1: #{tpu_custom_call.1} parent=0
    #allocation3 [shape = 'u8[16384]{0}', space=vmem, size = 0x4000, scoped, tag = 'input window, operand 0, single buffered']
    #allocation4 [shape = 's32[1]{0}', space=sflag, size = 0x4, scoped, tag = 'scoped memory for tpu_custom_call.1']
    #allocation5 [shape = 's32[1]{0}', space=sflag, size = 0x4, scoped, tag = 'scoped memory for tpu_custom_call.1']
    #allocation6 [shape = 'u8[131072]{0}', space=vmem, size = 0x20000, scoped, tag = 'input window, operand 1, single buffered']
    #allocation7 [shape = 's32[1]{0}', space=sflag, size = 0x4, scoped, tag = 'scoped memory for tpu_custom_call.1']
    #allocation8 [shape = 'u8[4096]{0}', space=vmem, size = 0x1000, scoped, tag = 'output window, operand 0, single buffered']
    %8 = vsyncpa [#allocation4], 0
    %9 = vsyncpa [#allocation7], 0
    %10 = vsyncpa [#allocation5], 0
    // Predicated region
    $region2: #{tpu_custom_call.1} parent=1 // pred_check
      _
    $region3: #{tpu_custom_call.1} parent=1 // pred_check_branch
      %12 = sbr.rel (0) target = $region5
    $region4: #{tpu_custom_call.1} parent=1 // pred_region
      %s14 = ssub.s32 512, 512
      %15 = vsyncadd [#allocation4], %s14
      %s17 = sshll.u32 [#allocation3], 4
      %s18 = int_to_ptr.vmem [resolvable:$true] %s17
      %20 = dma.hbm_to_vmem [thread:$0]  %s0, 512, %s18, [#allocation4]
    $region5: #{tpu_custom_call.1} parent=1 // pred_fallthru
      _
    // Predicated region
    $region6: #{tpu_custom_call.1} parent=1 // pred_check
      _
    $region7: #{tpu_custom_call.1} parent=1 // pred_check_branch
      %22 = sbr.rel (0) target = $region9
    $region8: #{tpu_custom_call.1} parent=1 // pred_region
      %s24 = ssub.s32 4096, 4096
      %25 = vsyncadd [#allocation7], %s24
      %s26 = sshll.u32 [#allocation6], 4
      %s27 = int_to_ptr.vmem [resolvable:$true] %s26
      %32 = dma.hbm_to_vmem [thread:$0]  %s1, 4096, %s27, [#allocation7], 64, 64, 4
    $region9: #{tpu_custom_call.1} parent=1 // pred_fallthru
      _
    // Predicated region
    $region10: #{tpu_custom_call.1} parent=1 // pred_check
      _
    $region11: #{tpu_custom_call.1} parent=1 // pred_check_branch
      %34 = sbr.rel (0) target = $region13
    $region12: #{tpu_custom_call.1} parent=1 // pred_region
      _
    $region13: #{tpu_custom_call.1} parent=1 // pred_fallthru
      _
    // Predicated region
    $region14: #{tpu_custom_call.1} parent=1 // pred_check
      _
    $region15: #{tpu_custom_call.1} parent=1 // pred_check_branch
      %36 = sbr.rel (0) target = $region17
    $region16: #{tpu_custom_call.1} parent=1 // pred_region
      %37 = dma.done [#allocation4], 512
    $region17: #{tpu_custom_call.1} parent=1 // pred_fallthru
      _
    // Predicated region
    $region18: #{tpu_custom_call.1} parent=1 // pred_check
      _
    $region19: #{tpu_custom_call.1} parent=1 // pred_check_branch
      %39 = sbr.rel (0) target = $region21
    $region20: #{tpu_custom_call.1} parent=1 // pred_region
      %40 = dma.done [#allocation7], 4096
    $region21: #{tpu_custom_call.1} parent=1 // pred_fallthru
      _
    %p42 = scmp.eq.s32.totalorder 0, 0
    // Predicated region
    $region22: #{tpu_custom_call.1} parent=1 // pred_check
      %p43 = pneg %p42
    $region23: #{tpu_custom_call.1} parent=1 // pred_check_branch
      %45 = sbr.rel (%p43) target = $region25
    $region24: #{tpu_custom_call.1} parent=1 // pred_region
      %v46 = vld [vmem:[%s2] sm:$0x1]
      %v48 = vlaneseq
      %v49 = vshrl.u32 %v48, 7
      %v50 = vsub.s32 0, %v49
      %v51 = vrot.slane %v46, %v50
      %v53 = vadd.f32 %v51, 0.0
      %54 = vst [vmem:[#allocation2] sm:$0xff] %v53
    $region25: #{tpu_custom_call.1} parent=1 // pred_fallthru
      _
    %v55 = vld [vmem:[#allocation2] sm:$0xff]
    %v56 = vld [vmem:[#allocation3] sm:$0xff]
    %v57 = vld [vmem:[#allocation3 + $0x8] sm:$0xff]
    %v58 = vld [vmem:[#allocation3 + $0x10] sm:$0xff]
    %v59 = vld [vmem:[#allocation3 + $0x18] sm:$0xff]
    %v60 = vpack.c.bf16 %v56, %v56
    %v61 = vpack.c.bf16 %v57, %v57
    %v62 = vpack.c.bf16 %v58, %v58
    %v63 = vpack.c.bf16 %v59, %v59
    %v64 = vld [vmem:[#allocation6] sm:$0xf]
    %v65 = vld [vmem:[#allocation6 + $0x4] sm:$0xf]
    %v66 = vld [vmem:[#allocation6 + $0x8] sm:$0xf]
    %v67 = vld [vmem:[#allocation6 + $0xc] sm:$0xf]
    %v68 = vld [vmem:[#allocation6 + $0x10] sm:$0xf]
    %v69 = vld [vmem:[#allocation6 + $0x14] sm:$0xf]
    %v70 = vld [vmem:[#allocation6 + $0x18] sm:$0xf]
    %v71 = vld [vmem:[#allocation6 + $0x1c] sm:$0xf]
    %v72 = vld [vmem:[#allocation6 + $0x20] sm:$0xf]
    %v73 = vld [vmem:[#allocation6 + $0x24] sm:$0xf]
    %v74 = vld [vmem:[#allocation6 + $0x28] sm:$0xf]
    %v75 = vld [vmem:[#allocation6 + $0x2c] sm:$0xf]
    %v76 = vld [vmem:[#allocation6 + $0x30] sm:$0xf]
    %v77 = vld [vmem:[#allocation6 + $0x34] sm:$0xf]
    %v78 = vld [vmem:[#allocation6 + $0x38] sm:$0xf]
    %v79 = vld [vmem:[#allocation6 + $0x3c] sm:$0xf]
    %v80 = vld [vmem:[#allocation6 + $0x40] sm:$0xf]
    %v81 = vld [vmem:[#allocation6 + $0x44] sm:$0xf]
    %v82 = vld [vmem:[#allocation6 + $0x48] sm:$0xf]
    %v83 = vld [vmem:[#allocation6 + $0x4c] sm:$0xf]
    %v84 = vld [vmem:[#allocation6 + $0x50] sm:$0xf]
    %v85 = vld [vmem:[#allocation6 + $0x54] sm:$0xf]
    %v86 = vld [vmem:[#allocation6 + $0x58] sm:$0xf]
    %v87 = vld [vmem:[#allocation6 + $0x5c] sm:$0xf]
    %v88 = vld [vmem:[#allocation6 + $0x60] sm:$0xf]
    %v89 = vld [vmem:[#allocation6 + $0x64] sm:$0xf]
    %v90 = vld [vmem:[#allocation6 + $0x68] sm:$0xf]
    %v91 = vld [vmem:[#allocation6 + $0x6c] sm:$0xf]
    %v92 = vld [vmem:[#allocation6 + $0x70] sm:$0xf]
    %v93 = vld [vmem:[#allocation6 + $0x74] sm:$0xf]
    %v94 = vld [vmem:[#allocation6 + $0x78] sm:$0xf]
    %v95 = vld [vmem:[#allocation6 + $0x7c] sm:$0xf]
    %v96 = vld [vmem:[#allocation6 + $0x80] sm:$0xf]
    %v97 = vld [vmem:[#allocation6 + $0x84] sm:$0xf]
    %v98 = vld [vmem:[#allocation6 + $0x88] sm:$0xf]
    %v99 = vld [vmem:[#allocation6 + $0x8c] sm:$0xf]
    %v100 = vld [vmem:[#allocation6 + $0x90] sm:$0xf]
    %v101 = vld [vmem:[#allocation6 + $0x94] sm:$0xf]
    %v102 = vld [vmem:[#allocation6 + $0x98] sm:$0xf]
    %v103 = vld [vmem:[#allocation6 + $0x9c] sm:$0xf]
    %v104 = vld [vmem:[#allocation6 + $0xa0] sm:$0xf]
    %v105 = vld [vmem:[#allocation6 + $0xa4] sm:$0xf]
    %v106 = vld [vmem:[#allocation6 + $0xa8] sm:$0xf]
    %v107 = vld [vmem:[#allocation6 + $0xac] sm:$0xf]
    %v108 = vld [vmem:[#allocation6 + $0xb0] sm:$0xf]
    %v109 = vld [vmem:[#allocation6 + $0xb4] sm:$0xf]
    %v110 = vld [vmem:[#allocation6 + $0xb8] sm:$0xf]
    %v111 = vld [vmem:[#allocation6 + $0xbc] sm:$0xf]
    %v112 = vld [vmem:[#allocation6 + $0xc0] sm:$0xf]
    %v113 = vld [vmem:[#allocation6 + $0xc4] sm:$0xf]
    %v114 = vld [vmem:[#allocation6 + $0xc8] sm:$0xf]
    %v115 = vld [vmem:[#allocation6 + $0xcc] sm:$0xf]
    %v116 = vld [vmem:[#allocation6 + $0xd0] sm:$0xf]
    %v117 = vld [vmem:[#allocation6 + $0xd4] sm:$0xf]
    %v118 = vld [vmem:[#allocation6 + $0xd8] sm:$0xf]
    %v119 = vld [vmem:[#allocation6 + $0xdc] sm:$0xf]
    %v120 = vld [vmem:[#allocation6 + $0xe0] sm:$0xf]
    %v121 = vld [vmem:[#allocation6 + $0xe4] sm:$0xf]
    %v122 = vld [vmem:[#allocation6 + $0xe8] sm:$0xf]
    %v123 = vld [vmem:[#allocation6 + $0xec] sm:$0xf]
    %v124 = vld [vmem:[#allocation6 + $0xf0] sm:$0xf]
    %v125 = vld [vmem:[#allocation6 + $0xf4] sm:$0xf]
    %v126 = vld [vmem:[#allocation6 + $0xf8] sm:$0xf]
    %v127 = vld [vmem:[#allocation6 + $0xfc] sm:$0xf]
    %v192 = vunpack.c.l.b16 %v64
    %v193 = vunpack.c.l.b16 %v65
    %v194 = vunpack.c.l.b16 %v66
    %v195 = vunpack.c.l.b16 %v67
    %v196 = vunpack.c.l.b16 %v68
    %v197 = vunpack.c.l.b16 %v69
    %v198 = vunpack.c.l.b16 %v70
    %v199 = vunpack.c.l.b16 %v71
    %v200 = vunpack.c.l.b16 %v72
    %v201 = vunpack.c.l.b16 %v73
    %v202 = vunpack.c.l.b16 %v74
    %v203 = vunpack.c.l.b16 %v75
    %v204 = vunpack.c.l.b16 %v76
    %v205 = vunpack.c.l.b16 %v77
    %v206 = vunpack.c.l.b16 %v78
    %v207 = vunpack.c.l.b16 %v79
    %v208 = vunpack.c.l.b16 %v80
    %v209 = vunpack.c.l.b16 %v81
    %v210 = vunpack.c.l.b16 %v82
    %v211 = vunpack.c.l.b16 %v83
    %v212 = vunpack.c.l.b16 %v84
    %v213 = vunpack.c.l.b16 %v85
    %v214 = vunpack.c.l.b16 %v86
    %v215 = vunpack.c.l.b16 %v87
    %v216 = vunpack.c.l.b16 %v88
    %v217 = vunpack.c.l.b16 %v89
    %v218 = vunpack.c.l.b16 %v90
    %v219 = vunpack.c.l.b16 %v91
    %v220 = vunpack.c.l.b16 %v92
    %v221 = vunpack.c.l.b16 %v93
    %v222 = vunpack.c.l.b16 %v94
    %v223 = vunpack.c.l.b16 %v95
    %v224 = vunpack.c.l.b16 %v96
    %v225 = vunpack.c.l.b16 %v97
    %v226 = vunpack.c.l.b16 %v98
    %v227 = vunpack.c.l.b16 %v99
    %v228 = vunpack.c.l.b16 %v100
    %v229 = vunpack.c.l.b16 %v101
    %v230 = vunpack.c.l.b16 %v102
    %v231 = vunpack.c.l.b16 %v103
    %v232 = vunpack.c.l.b16 %v104
    %v233 = vunpack.c.l.b16 %v105
    %v234 = vunpack.c.l.b16 %v106
    %v235 = vunpack.c.l.b16 %v107
    %v236 = vunpack.c.l.b16 %v108
    %v237 = vunpack.c.l.b16 %v109
    %v238 = vunpack.c.l.b16 %v110
    %v239 = vunpack.c.l.b16 %v111
    %v240 = vunpack.c.l.b16 %v112
    %v241 = vunpack.c.l.b16 %v113
    %v242 = vunpack.c.l.b16 %v114
    %v243 = vunpack.c.l.b16 %v115
    %v244 = vunpack.c.l.b16 %v116
    %v245 = vunpack.c.l.b16 %v117
    %v246 = vunpack.c.l.b16 %v118
    %v247 = vunpack.c.l.b16 %v119
    %v248 = vunpack.c.l.b16 %v120
    %v249 = vunpack.c.l.b16 %v121
    %v250 = vunpack.c.l.b16 %v122
    %v251 = vunpack.c.l.b16 %v123
    %v252 = vunpack.c.l.b16 %v124
    %v253 = vunpack.c.l.b16 %v125
    %v254 = vunpack.c.l.b16 %v126
    %v255 = vunpack.c.l.b16 %v127
    %v256 = vpack.c.b16 %v193, %v192
    %v257 = vpack.c.b16 %v195, %v194
    %v258 = vpack.c.b16 %v197, %v196
    %v259 = vpack.c.b16 %v199, %v198
    %v260 = vpack.c.b16 %v201, %v200
    %v261 = vpack.c.b16 %v203, %v202
    %v262 = vpack.c.b16 %v205, %v204
    %v263 = vpack.c.b16 %v207, %v206
    %v264 = vpack.c.b16 %v209, %v208
    %v265 = vpack.c.b16 %v211, %v210
    %v266 = vpack.c.b16 %v213, %v212
    %v267 = vpack.c.b16 %v215, %v214
    %v268 = vpack.c.b16 %v217, %v216
    %v269 = vpack.c.b16 %v219, %v218
    %v270 = vpack.c.b16 %v221, %v220
    %v271 = vpack.c.b16 %v223, %v222
    %v272 = vpack.c.b16 %v225, %v224
    %v273 = vpack.c.b16 %v227, %v226
    %v274 = vpack.c.b16 %v229, %v228
    %v275 = vpack.c.b16 %v231, %v230
    %v276 = vpack.c.b16 %v233, %v232
    %v277 = vpack.c.b16 %v235, %v234
    %v278 = vpack.c.b16 %v237, %v236
    %v279 = vpack.c.b16 %v239, %v238
    %v280 = vpack.c.b16 %v241, %v240
    %v281 = vpack.c.b16 %v243, %v242
    %v282 = vpack.c.b16 %v245, %v244
    %v283 = vpack.c.b16 %v247, %v246
    %v284 = vpack.c.b16 %v249, %v248
    %v285 = vpack.c.b16 %v251, %v250
    %v286 = vpack.c.b16 %v253, %v252
    %v287 = vpack.c.b16 %v255, %v254
    %320 = vmatprep.subr.bf16.mxu0 0
    %321 = vmatpush1.bf16.msra.mxu0 %v256
    %322 = vmatprep.subr.bf16.mxu0 0
    %323 = vmatpush1.bf16.msra.mxu0 %v257
    %324 = vmatprep.subr.bf16.mxu0 0
    %325 = vmatpush1.bf16.msra.mxu0 %v258
    %326 = vmatprep.subr.bf16.mxu0 0
    %327 = vmatpush1.bf16.msra.mxu0 %v259
    %328 = vmatprep.subr.bf16.mxu0 0
    %329 = vmatpush1.bf16.msra.mxu0 %v260
    %330 = vmatprep.subr.bf16.mxu0 0
    %331 = vmatpush1.bf16.msra.mxu0 %v261
    %332 = vmatprep.subr.bf16.mxu0 0
    %333 = vmatpush1.bf16.msra.mxu0 %v262
    %334 = vmatprep.subr.bf16.mxu0 0
    %335 = vmatpush1.bf16.msra.mxu0 %v263
    %336 = vmatprep.subr.bf16.mxu0 0
    %337 = vmatpush1.bf16.msra.mxu0 %v264
    %338 = vmatprep.subr.bf16.mxu0 0
    %339 = vmatpush1.bf16.msra.mxu0 %v265
    %340 = vmatprep.subr.bf16.mxu0 0
    %341 = vmatpush1.bf16.msra.mxu0 %v266
    %342 = vmatprep.subr.bf16.mxu0 0
    %343 = vmatpush1.bf16.msra.mxu0 %v267
    %344 = vmatprep.subr.bf16.mxu0 0
    %345 = vmatpush1.bf16.msra.mxu0 %v268
    %346 = vmatprep.subr.bf16.mxu0 0
    %347 = vmatpush1.bf16.msra.mxu0 %v269
    %348 = vmatprep.subr.bf16.mxu0 0
    %349 = vmatpush1.bf16.msra.mxu0 %v270
    %350 = vmatprep.subr.bf16.mxu0 0
    %351 = vmatpush1.bf16.msra.mxu0 %v271
    %352 = vmatprep.mubr.bf16.mxu0 %v61
    %353 = vmatmul.mubr.bf16.gmra.mrb[0].mxu0 %v60
    %v354 = vpop.f32.mrb[0].mxu0
    %v355 = vadd.f32 0.0, %v354
    %v356 = vpop.f32.mrb[0].mxu0
    %v357 = vpop.f32.mrb[0].mxu0
    %v358 = vpop.f32.mrb[0].mxu0
    %359 = vdwg.mxu0
    %360 = vmatprep.subr.bf16.mxu0 0
    %361 = vmatpush1.bf16.msra.mxu0 %v272
    %362 = vmatprep.subr.bf16.mxu0 0
    %363 = vmatpush1.bf16.msra.mxu0 %v273
    %364 = vmatprep.subr.bf16.mxu0 0
    %365 = vmatpush1.bf16.msra.mxu0 %v274
    %366 = vmatprep.subr.bf16.mxu0 0
    %367 = vmatpush1.bf16.msra.mxu0 %v275
    %368 = vmatprep.subr.bf16.mxu0 0
    %369 = vmatpush1.bf16.msra.mxu0 %v276
    %370 = vmatprep.subr.bf16.mxu0 0
    %371 = vmatpush1.bf16.msra.mxu0 %v277
    %372 = vmatprep.subr.bf16.mxu0 0
    %373 = vmatpush1.bf16.msra.mxu0 %v278
    %374 = vmatprep.subr.bf16.mxu0 0
    %375 = vmatpush1.bf16.msra.mxu0 %v279
    %376 = vmatprep.subr.bf16.mxu0 0
    %377 = vmatpush1.bf16.msra.mxu0 %v280
    %378 = vmatprep.subr.bf16.mxu0 0
    %379 = vmatpush1.bf16.msra.mxu0 %v281
    %380 = vmatprep.subr.bf16.mxu0 0
    %381 = vmatpush1.bf16.msra.mxu0 %v282
    %382 = vmatprep.subr.bf16.mxu0 0
    %383 = vmatpush1.bf16.msra.mxu0 %v283
    %384 = vmatprep.subr.bf16.mxu0 0
    %385 = vmatpush1.bf16.msra.mxu0 %v284
    %386 = vmatprep.subr.bf16.mxu0 0
    %387 = vmatpush1.bf16.msra.mxu0 %v285
    %388 = vmatprep.subr.bf16.mxu0 0
    %389 = vmatpush1.bf16.msra.mxu0 %v286
    %390 = vmatprep.subr.bf16.mxu0 0
    %391 = vmatpush1.bf16.msra.mxu0 %v287
    %392 = vmatprep.mubr.bf16.mxu0 %v63
    %393 = vmatmul.mubr.bf16.gmra.mrb[0].mxu0 %v62
    %v394 = vpop.f32.mrb[0].mxu0
    %v395 = vadd.f32 %v355, %v394
    %v396 = vpop.f32.mrb[0].mxu0
    %v397 = vpop.f32.mrb[0].mxu0
    %v398 = vpop.f32.mrb[0].mxu0
    %399 = vdwg.mxu0
    %v400 = vadd.f32 %v55, %v395
    %401 = vst [vmem:[#allocation2] sm:$0xff] %v400
    // Predicated region
    $region26: #{tpu_custom_call.1} parent=1 // pred_check
      %p402 = pneg %p42
    $region27: #{tpu_custom_call.1} parent=1 // pred_check_branch
      %404 = sbr.rel (%p402) target = $region29
    $region28: #{tpu_custom_call.1} parent=1 // pred_region
      %v405 = vld [vmem:[#allocation2] sm:$0xff]
      %406 = vst [vmem:[#allocation8] sm:$0xff] %v405
    $region29: #{tpu_custom_call.1} parent=1 // pred_fallthru
      _
    // Predicated region
    $region30: #{tpu_custom_call.1} parent=1 // pred_check
      _
    $region31: #{tpu_custom_call.1} parent=1 // pred_check_branch
      %408 = sbr.rel (0) target = $region33
    $region32: #{tpu_custom_call.1} parent=1 // pred_region
      %s410 = ssub.s32 128, 128
      %411 = vsyncadd [#allocation5], %s410
      %s413 = sshll.u32 [#allocation8], 4
      %s414 = int_to_ptr.vmem [resolvable:$true] %s413
      %416 = dma.vmem_to_hbm [thread:$0]  %s414, 128, %s3, [#allocation5]
    $region33: #{tpu_custom_call.1} parent=1 // pred_fallthru
      _
    // Predicated region
    $region34: #{tpu_custom_call.1} parent=1 // pred_check
      _
    $region35: #{tpu_custom_call.1} parent=1 // pred_check_branch
      %418 = sbr.rel (0) target = $region37
    $region36: #{tpu_custom_call.1} parent=1 // pred_region
      %419 = dma.done [#allocation5], 128
    $region37: #{tpu_custom_call.1} parent=1 // pred_fallthru
      _
    %420 = vsyncpa [#allocation4], 1
    %421 = vsyncpa [#allocation7], 1
    %422 = vsyncpa [#allocation5], 1

</llo_original>
